<compile_context>
chip_gen: v7x
topology: tpu7x:2x2x1
jax: 0.10.0
libtpu: 0.0.40
codegen_flags: <defaults>
</compile_context>

<pallas_src>
import jax
import jax.numpy as jnp
from jax.experimental import pallas as pl
from jax.experimental.pallas import tpu as pltpu


def _round_up(x, m):
    return ((x + m - 1) // m) * m


def _cdiv(a, b):
    return -(-a // b)


def mlp_kernel(x_ref, w1_ref, b1_ref, w2_ref, b2_ref, o_ref):
    # fc1: x @ W1 (bf16 in, f32 accumulate on the MXU), +b1 and ReLU in f32.
    h = jnp.dot(x_ref[...], w1_ref[...], preferred_element_type=jnp.float32)
    h = jnp.maximum(h + b1_ref[...], 0.0)                # (TB,128) + (1,128)
    # fc2 at 128-lane-padded width in VMEM (lane-dense compute), f32 accumulate.
    h2 = jnp.dot(h.astype(w2_ref.dtype), w2_ref[...],
                 preferred_element_type=jnp.float32) + b2_ref[...]
    # Store only the true action width (o_ref last dim == A == full array dim).
    o_ref[...] = h2[:, : o_ref.shape[1]]


def simple_agent_forward(x, w1, b1, w2, b2, *, block_b=2048,
                         compute_dtype=jnp.bfloat16):
    """relu(x @ w1 + b1) @ w2 + b2.

    x:  (B, input_size) f32
    w1: (input_size, 128) f32   (pre-transposed vs. torch Linear.weight)
    b1: (1, 128) f32
    w2: (128, action_space) f32
    b2: (1, action_space) f32
    Returns (B, action_space) f32.
    """
    B, D = x.shape
    H = w1.shape[1]
    A = w2.shape[1]
    itemsize_c = jnp.dtype(compute_dtype).itemsize

    # --- lane-dense fc2 compute: pad only the (tiny) weights to 128 lanes ----
    A_pad = _round_up(A, 128)
    if A_pad != A:
        w2 = jnp.pad(w2, ((0, 0), (0, A_pad - A)))
        b2 = jnp.pad(b2, ((0, 0), (0, A_pad - A)))

    # bf16 matmul operands (f32 accumulation in-kernel); biases stay f32.
    # NOTE: for strict f32 parity with PyTorch, pass compute_dtype=jnp.float32
    # and use precision=lax.Precision.HIGHEST on the dots (kernel is HBM-bound,
    # so the extra MXU passes are free).
    x_c = x.astype(compute_dtype)
    w1_c = w1.astype(compute_dtype)
    w2_c = w2.astype(compute_dtype)

    # --- batch tiling: bounded waste, no wrapper pad, >=2 steps when possible -
    # Keep double-buffered x+out tiles comfortably inside VMEM for large D.
    row_bytes = D * itemsize_c + A * 4
    max_tile_rows = max(8, ((8 << 20) // max(row_bytes, 1)) // 8 * 8)
    block_b = max(8, min(block_b, max_tile_rows))

    n = max(1, _cdiv(B, block_b))
    if n == 1 and B >= 16:
        n = 2                       # let v7x's 2nd TensorCore participate
    TB = _round_up(_cdiv(B, n), 8)  # sublane-aligned tile
    n = _cdiv(B, TB)                # ragged last block is masked by Pallas
    grid = (n,)

    # --- per-generation VMEM budget ------------------------------------------
    try:
        vmem_capacity = pltpu.get_tpu_info().vmem_capacity_bytes
    except Exception:
        vmem_capacity = 64 * 1024 * 1024  # conservative (v7x per-TC)
    vmem_cap_budget = int(0.75 * vmem_capacity)  # 48 MiB on v7x, 96 MiB on v5e/v6e

    tile_bytes = 2 * TB * (D * itemsize_c + A * 4)                  # dbl-buffered x/out
    weight_bytes = 2 * ((D * H + H * A_pad) * itemsize_c + (H + A_pad) * 4)
    vmem_limit = min(vmem_cap_budget,
                     max(4 * 1024 * 1024, 2 * (tile_bytes + weight_bytes)))
    # TODO(synk): on v7x, pipeline_mode=pl.Buffered(1) on the constant-index
    # weight specs would drop their second buffer; skipped (negligible here).

    cost = pl.CostEstimate(
        flops=2 * B * (D * H + H * A_pad),
        transcendentals=0,
        bytes_accessed=(B * D * itemsize_c
                        + (D * H + H * A_pad) * itemsize_c
                        + (H + A_pad) * 4
                        + B * A * 4),
    )

    out = pl.pallas_call(
        mlp_kernel,
        out_shape=jax.ShapeDtypeStruct((B, A), jnp.float32),
        grid=grid,
        in_specs=[
            pl.BlockSpec((TB, D), lambda i: (i, 0)),      # x: tiled over batch
            pl.BlockSpec((D, H), lambda i: (0, 0)),       # w1: resident in VMEM
            pl.BlockSpec((1, H), lambda i: (0, 0)),       # b1: resident
            pl.BlockSpec((H, A_pad), lambda i: (0, 0)),   # w2: resident (padded)
            pl.BlockSpec((1, A_pad), lambda i: (0, 0)),   # b2: resident (padded)
        ],
        out_specs=pl.BlockSpec((TB, A), lambda i: (i, 0)),   # true-width output
        compiler_params=pltpu.CompilerParams(
            dimension_semantics=("parallel",),   # batch axis over v7x's 2 TCs
            vmem_limit_bytes=vmem_limit,
        ),
        cost_estimate=cost,
    )(x_c, w1_c, b1, w2_c, b2)

    return out


def init_params(key, input_size, action_space, hidden=128):
    """Deterministic init matching nn.Linear default (uniform(-1/sqrt(fan_in), +))."""
    k1, k2, k3, k4 = jax.random.split(key, 4)
    bound1 = 1.0 / jnp.sqrt(input_size)
    bound2 = 1.0 / jnp.sqrt(hidden)
    # Stored pre-transposed: (in_features, out_features)
    w1 = jax.random.uniform(k1, (input_size, hidden), jnp.float32, -bound1, bound1)
    b1 = jax.random.uniform(k2, (1, hidden), jnp.float32, -bound1, bound1)
    w2 = jax.random.uniform(k3, (hidden, action_space), jnp.float32, -bound2, bound2)
    b2 = jax.random.uniform(k4, (1, action_space), jnp.float32, -bound2, bound2)
    return w1, b1, w2, b2


if __name__ == "__main__":
    input_size = 32
    action_space = 8
    batch = 2

    key = jax.random.PRNGKey(0)
    kx, kp = jax.random.split(key)
    x = jax.random.normal(kx, (batch, input_size), jnp.float32)
    w1, b1, w2, b2 = init_params(kp, input_size, action_space)

    out = simple_agent_forward(x, w1, b1, w2, b2)
    jax.block_until_ready(out)
    assert out.shape == (batch, action_space)

    # Reference at matching precision (bf16 operands, f32 accumulation).
    xb, w1b, w2b = (a.astype(jnp.bfloat16) for a in (x, w1, w2))
    h_ref = jnp.maximum(
        jnp.dot(xb, w1b, preferred_element_type=jnp.float32) + b1, 0.0)
    ref = jnp.dot(h_ref.astype(jnp.bfloat16), w2b,
                  preferred_element_type=jnp.float32) + b2
    assert jnp.allclose(out, ref, atol=1e-4, rtol=1e-4)

    # Loose sanity check against the full-f32 reference.
    ref_f32 = jnp.maximum(x @ w1 + b1, 0.0) @ w2 + b2
    assert jnp.allclose(out, ref_f32, atol=5e-2, rtol=5e-2)

    print("KERNEL_OK")
</pallas_src>

<mosaic_0001>
module attributes {stable_mosaic.version = 11 : i64} {
  func.func @mlp_kernel(%arg0: i32, %arg1: memref<8x32xbf16, #tpu.memory_space<vmem>>, %arg2: memref<32x128xbf16, #tpu.memory_space<vmem>>, %arg3: memref<1x128xf32, #tpu.memory_space<vmem>>, %arg4: memref<128x128xbf16, #tpu.memory_space<vmem>>, %arg5: memref<1x128xf32, #tpu.memory_space<vmem>>, %arg6: memref<8x8xf32, #tpu.memory_space<vmem>>) attributes {dimension_semantics = [#tpu.dimension_semantics<parallel>], iteration_bounds = array<i64: 1>, scalar_prefetch = 0 : i64, scratch_operands = 0 : i64, tpu.core_type = #tpu.core_type<tc>, window_params = [{transform_indices = @transform_0, window_bounds = array<i64: 8, 32>}, {pipeline_mode = #tpu.pipeline_mode<synchronous>, transform_indices = @transform_1, window_bounds = array<i64: 32, 128>}, {pipeline_mode = #tpu.pipeline_mode<synchronous>, transform_indices = @transform_2, window_bounds = array<i64: 1, 128>}, {pipeline_mode = #tpu.pipeline_mode<synchronous>, transform_indices = @transform_3, window_bounds = array<i64: 128, 128>}, {pipeline_mode = #tpu.pipeline_mode<synchronous>, transform_indices = @transform_4, window_bounds = array<i64: 1, 128>}, {transform_indices = @transform_5, window_bounds = array<i64: 8, 8>}]} {
    %c0 = arith.constant 0 : index
    %c0_0 = arith.constant 0 : index
    %0 = vector.load %arg1[%c0, %c0_0] : memref<8x32xbf16, #tpu.memory_space<vmem>>, vector<8x32xbf16>
    %c0_1 = arith.constant 0 : index
    %c0_2 = arith.constant 0 : index
    %1 = vector.load %arg2[%c0_1, %c0_2] : memref<32x128xbf16, #tpu.memory_space<vmem>>, vector<32x128xbf16>
    %cst = arith.constant dense<0.000000e+00> : vector<8x128xf32>
    %2 = tpu.matmul %0, %1, %cst {dimension_numbers = #tpu.dot_dimension_numbers<[1], [0], [0], [1], [0, 0, 1, 1], [], []>} : vector<8x32xbf16>, vector<32x128xbf16>, vector<8x128xf32> -> vector<8x128xf32>
    %c0_3 = arith.constant 0 : index
    %c0_4 = arith.constant 0 : index
    %3 = vector.load %arg3[%c0_3, %c0_4] : memref<1x128xf32, #tpu.memory_space<vmem>>, vector<1x128xf32>
    %4 = vector.broadcast %3 : vector<1x128xf32> to vector<8x128xf32>
    %5 = arith.addf %2, %4 : vector<8x128xf32>
    %cst_5 = arith.constant 0.000000e+00 : f32
    %6 = vector.broadcast %cst_5 : f32 to vector<8x128xf32>
    %7 = arith.maximumf %5, %6 : vector<8x128xf32>
    %8 = arith.truncf %7 : vector<8x128xf32> to vector<8x128xbf16>
    %c0_6 = arith.constant 0 : index
    %c0_7 = arith.constant 0 : index
    %9 = vector.load %arg4[%c0_6, %c0_7] : memref<128x128xbf16, #tpu.memory_space<vmem>>, vector<128x128xbf16>
    %cst_8 = arith.constant dense<0.000000e+00> : vector<8x128xf32>
    %10 = tpu.matmul %8, %9, %cst_8 {dimension_numbers = #tpu.dot_dimension_numbers<[1], [0], [0], [1], [0, 0, 1, 1], [], []>} : vector<8x128xbf16>, vector<128x128xbf16>, vector<8x128xf32> -> vector<8x128xf32>
    %c0_9 = arith.constant 0 : index
    %c0_10 = arith.constant 0 : index
    %11 = vector.load %arg5[%c0_9, %c0_10] : memref<1x128xf32, #tpu.memory_space<vmem>>, vector<1x128xf32>
    %12 = vector.broadcast %11 : vector<1x128xf32> to vector<8x128xf32>
    %13 = arith.addf %10, %12 : vector<8x128xf32>
    %14 = vector.extract_strided_slice %13 {offsets = [0, 0], sizes = [8, 8], strides = [1, 1]} : vector<8x128xf32> to vector<8x8xf32>
    %c0_11 = arith.constant 0 : index
    %c0_12 = arith.constant 0 : index
    %15 = vector.load %arg6[%c0_11, %c0_12] : memref<8x8xf32, #tpu.memory_space<vmem>>, vector<8x8xf32>
    tpu.vector_store %arg6[%c0_11, %c0_12], %14 {strides = array<i32>} : memref<8x8xf32, #tpu.memory_space<vmem>>, vector<8x8xf32>,
    return
  }
  func.func @transform_0(%arg0: i32) -> (i32, i32) {
    %c0_i32 = arith.constant 0 : i32
    %c0_i32_0 = arith.constant 0 : i32
    return %arg0, %c0_i32 : i32, i32
  }
  func.func @transform_1(%arg0: i32) -> (i32, i32) {
    %c0_i32 = arith.constant 0 : i32
    %c0_i32_0 = arith.constant 0 : i32
    %c0_i32_1 = arith.constant 0 : i32
    return %c0_i32, %c0_i32_0 : i32, i32
  }
  func.func @transform_2(%arg0: i32) -> (i32, i32) {
    %c0_i32 = arith.constant 0 : i32
    %c0_i32_0 = arith.constant 0 : i32
    %c0_i32_1 = arith.constant 0 : i32
    return %c0_i32, %c0_i32_0 : i32, i32
  }
  func.func @transform_3(%arg0: i32) -> (i32, i32) {
    %c0_i32 = arith.constant 0 : i32
    %c0_i32_0 = arith.constant 0 : i32
    %c0_i32_1 = arith.constant 0 : i32
    return %c0_i32, %c0_i32_0 : i32, i32
  }
  func.func @transform_4(%arg0: i32) -> (i32, i32) {
    %c0_i32 = arith.constant 0 : i32
    %c0_i32_0 = arith.constant 0 : i32
    %c0_i32_1 = arith.constant 0 : i32
    return %c0_i32, %c0_i32_0 : i32, i32
  }
  func.func @transform_5(%arg0: i32) -> (i32, i32) {
    %c0_i32 = arith.constant 0 : i32
    %c0_i32_0 = arith.constant 0 : i32
    return %arg0, %c0_i32 : i32, i32
  }
}

</mosaic_0001>

<llo_original>
// kernel: tpu_custom_call.1
$region0: #{tpu_custom_call.1}
  #allocation0 [shape = 'u32[]', space=smem, size = 0x4, offset = 0x4, fixed_abs, tag = 'smem constant byte address 0x4 - core index']
  #allocation1 [shape = 'u32[144,128]{1,0:T(1,128)}', space=vmem, size = 0x12000, scoped, tag = 'internal scratch']
  %s0 = inlined_call_operand.hbm [shape: bf16[2,32], index: 0, kind: input, shape index: {}]
  %s1 = inlined_call_operand.hbm [shape: bf16[32,128], index: 1, kind: input, shape index: {}]
  %s2 = inlined_call_operand.vmem [shape: f32[1,128], index: 2, kind: input, shape index: {}]
  %s3 = inlined_call_operand.hbm [shape: bf16[128,128], index: 3, kind: input, shape index: {}]
  %s4 = inlined_call_operand.vmem [shape: f32[1,128], index: 4, kind: input, shape index: {}]
  %s5 = inlined_call_operand.hbm [shape: f32[2,8], index: 5, kind: output, shape index: {}]
  %s6 = sld [smem:[#allocation0]]
  $region42: #{tpu_custom_call.1} parent=0
    _
  %s8 = ssub.s32 1, %s6
  %s9 = scalar_select 0, %s8, %s6
  $region1: #{tpu_custom_call.1} parent=0
    #allocation2 [shape = 'u8[2048]{0}', space=vmem, size = 0x800, scoped, tag = 'input window, operand 0, single buffered']
    #allocation3 [shape = 's32[1]{0}', space=sflag, size = 0x4, scoped, tag = 'scoped memory for tpu_custom_call.1']
    #allocation4 [shape = 's32[1]{0}', space=sflag, size = 0x4, scoped, tag = 'scoped memory for tpu_custom_call.1']
    #allocation5 [shape = 'u8[8192]{0}', space=vmem, size = 0x2000, scoped, tag = 'input window, operand 1, single buffered']
    #allocation6 [shape = 's32[1]{0}', space=sflag, size = 0x4, scoped, tag = 'scoped memory for tpu_custom_call.1']
    #allocation7 [shape = 'u8[32768]{0}', space=vmem, size = 0x8000, scoped, tag = 'input window, operand 3, single buffered']
    #allocation8 [shape = 'u8[4096]{0}', space=vmem, size = 0x1000, scoped, tag = 'output window, operand 0, single buffered']
    %10 = vsyncpa [#allocation3], 0
    %11 = vsyncpa [#allocation6], 0
    %12 = vsyncpa [#allocation4], 0
    // Predicated region
    $region2: #{tpu_custom_call.1} parent=1 // pred_check
      _
    $region3: #{tpu_custom_call.1} parent=1 // pred_check_branch
      %14 = sbr.rel (0) target = $region5
    $region4: #{tpu_custom_call.1} parent=1 // pred_region
      %s16 = ssub.s32 64, 16
      %17 = vsyncadd [#allocation3], %s16
      %s18 = sshll.u32 [#allocation2], 4
      %s19 = int_to_ptr.vmem [resolvable:$true] %s18
      %24 = dma.hbm_to_vmem [thread:$0]  %s0, 16, %s19, [#allocation3], 16, 16, 1
    $region5: #{tpu_custom_call.1} parent=1 // pred_fallthru
      _
    // Predicated region
    $region6: #{tpu_custom_call.1} parent=1 // pred_check
      _
    $region7: #{tpu_custom_call.1} parent=1 // pred_check_branch
      %26 = sbr.rel (0) target = $region9
    $region8: #{tpu_custom_call.1} parent=1 // pred_region
      %s28 = ssub.s32 256, 256
      %29 = vsyncadd [#allocation6], %s28
      %s30 = sshll.u32 [#allocation5], 4
      %s31 = int_to_ptr.vmem [resolvable:$true] %s30
      %36 = dma.hbm_to_vmem [thread:$0]  %s1, 256, %s31, [#allocation6], 64, 64, 4
    $region9: #{tpu_custom_call.1} parent=1 // pred_fallthru
      _
    // Predicated region
    $region10: #{tpu_custom_call.1} parent=1 // pred_check
      _
    $region11: #{tpu_custom_call.1} parent=1 // pred_check_branch
      %38 = sbr.rel (0) target = $region13
    $region12: #{tpu_custom_call.1} parent=1 // pred_region
      _
    $region13: #{tpu_custom_call.1} parent=1 // pred_fallthru
      _
    // Predicated region
    $region14: #{tpu_custom_call.1} parent=1 // pred_check
      _
    $region15: #{tpu_custom_call.1} parent=1 // pred_check_branch
      %40 = sbr.rel (0) target = $region17
    $region16: #{tpu_custom_call.1} parent=1 // pred_region
      %s42 = ssub.s32 1024, 1024
      %43 = vsyncadd [#allocation6], %s42
      %s44 = sshll.u32 [#allocation7], 4
      %s45 = int_to_ptr.vmem [resolvable:$true] %s44
      %50 = dma.hbm_to_vmem [thread:$0]  %s3, 1024, %s45, [#allocation6], 64, 64, 4
    $region17: #{tpu_custom_call.1} parent=1 // pred_fallthru
      _
    // Predicated region
    $region18: #{tpu_custom_call.1} parent=1 // pred_check
      _
    $region19: #{tpu_custom_call.1} parent=1 // pred_check_branch
      %52 = sbr.rel (0) target = $region21
    $region20: #{tpu_custom_call.1} parent=1 // pred_region
      _
    $region21: #{tpu_custom_call.1} parent=1 // pred_fallthru
      _
    // Predicated region
    $region22: #{tpu_custom_call.1} parent=1 // pred_check
      _
    $region23: #{tpu_custom_call.1} parent=1 // pred_check_branch
      %54 = sbr.rel (0) target = $region25
    $region24: #{tpu_custom_call.1} parent=1 // pred_region
      %55 = dma.done [#allocation3], 64
    $region25: #{tpu_custom_call.1} parent=1 // pred_fallthru
      _
    // Predicated region
    $region26: #{tpu_custom_call.1} parent=1 // pred_check
      _
    $region27: #{tpu_custom_call.1} parent=1 // pred_check_branch
      %57 = sbr.rel (0) target = $region29
    $region28: #{tpu_custom_call.1} parent=1 // pred_region
      %58 = dma.done [#allocation6], 256
    $region29: #{tpu_custom_call.1} parent=1 // pred_fallthru
      _
    // Predicated region
    $region30: #{tpu_custom_call.1} parent=1 // pred_check
      _
    $region31: #{tpu_custom_call.1} parent=1 // pred_check_branch
      %60 = sbr.rel (0) target = $region33
    $region32: #{tpu_custom_call.1} parent=1 // pred_region
      %61 = dma.done [#allocation6], 1024
    $region33: #{tpu_custom_call.1} parent=1 // pred_fallthru
      _
    %v63 = vld [vmem:[#allocation2] sm:$0x1]
    %v64 = vld [vmem:[#allocation2 + $0x1] sm:$0x1]
    %v65 = vld [vmem:[#allocation2 + $0x2] sm:$0x1]
    %v66 = vld [vmem:[#allocation2 + $0x3] sm:$0x1]
    %v67 = vld [vmem:[#allocation5] sm:$0xf]
    %v68 = vld [vmem:[#allocation5 + $0x4] sm:$0xf]
    %v69 = vld [vmem:[#allocation5 + $0x8] sm:$0xf]
    %v70 = vld [vmem:[#allocation5 + $0xc] sm:$0xf]
    %v71 = vld [vmem:[%s2] sm:$0x1]
    %v73 = vlaneseq
    %v74 = vshrl.u32 %v73, 7
    %v75 = vsub.s32 0, %v74
    %v76 = vrot.slane %v71, %v75
    %v82 = vcombine.low %v63, %v64
    %v83 = vcombine.low %v65, %v66
    %v85 = vunpack.c.l.s4 1966171168
    %v86 = vunpack.c.0.s8 %v85
    %v87 = vlaneseq
    %v88 = vshrl.u32 %v87, 7
    %v89 = vsub.s32 %v86, %v88
    %v90 = vrot.slane %v82, %v89
    %v92 = vunpack.c.l.s4 1966171168
    %v93 = vunpack.c.0.s8 %v92
    %v94 = vlaneseq
    %v95 = vshrl.u32 %v94, 7
    %v96 = vsub.s32 %v93, %v95
    %v97 = vrot.slane %v83, %v96
    %v98 = vcombine.low %v90, %v97
    %v100 = vunpack.c.l.s4 1966171168
    %v101 = vunpack.c.0.s8 %v100
    %v102 = vlaneseq
    %v103 = vshrl.u32 %v102, 7
    %v104 = vsub.s32 %v101, %v103
    %v105 = vrot.slane %v98, %v104
    %v110 = vunpack.c.l.b16 %v67
    %v111 = vunpack.c.l.b16 %v68
    %v112 = vunpack.c.l.b16 %v69
    %v113 = vunpack.c.l.b16 %v70
    %v114 = vpack.c.b16 %v111, %v110
    %v115 = vpack.c.b16 %v113, %v112
    %vm118 = vcmask 261120
    %v120 = vsel %vm118, %v105, 0
    %122 = vmatprep.subr.bf16.mxu0 0
    %123 = vmatpush1.bf16.msra.mxu0 %v114
    %124 = vmatprep.subr.bf16.mxu0 0
    %125 = vmatpush1.bf16.msra.mxu0 %v115
    %126 = vmatprep.subr.bf16.mxu0 0
    %127 = vmatpush1.bf16.msra.mxu0 0
    %128 = vmatprep.subr.bf16.mxu0 0
    %129 = vmatpush1.bf16.msra.mxu0 0
    %130 = vmatprep.subr.bf16.mxu0 0
    %131 = vmatpush1.bf16.msra.mxu0 0
    %132 = vmatprep.subr.bf16.mxu0 0
    %133 = vmatpush1.bf16.msra.mxu0 0
    %134 = vmatprep.subr.bf16.mxu0 0
    %135 = vmatpush1.bf16.msra.mxu0 0
    %136 = vmatprep.subr.bf16.mxu0 0
    %137 = vmatpush1.bf16.msra.mxu0 0
    %138 = vmatprep.subr.bf16.mxu0 0
    %139 = vmatpush1.bf16.msra.mxu0 0
    %140 = vmatprep.subr.bf16.mxu0 0
    %141 = vmatpush1.bf16.msra.mxu0 0
    %142 = vmatprep.subr.bf16.mxu0 0
    %143 = vmatpush1.bf16.msra.mxu0 0
    %144 = vmatprep.subr.bf16.mxu0 0
    %145 = vmatpush1.bf16.msra.mxu0 0
    %146 = vmatprep.subr.bf16.mxu0 0
    %147 = vmatpush1.bf16.msra.mxu0 0
    %148 = vmatprep.subr.bf16.mxu0 0
    %149 = vmatpush1.bf16.msra.mxu0 0
    %150 = vmatprep.subr.bf16.mxu0 0
    %151 = vmatpush1.bf16.msra.mxu0 0
    %152 = vmatprep.subr.bf16.mxu0 0
    %153 = vmatpush1.bf16.msra.mxu0 0
    %154 = vmatprep.mubr.bf16.mxu0 0
    %155 = vmatmul.mubr.bf16.gmra.mrb[0].mxu0 %v120
    %v156 = vpop.f32.mrb[0].mxu0
    %v157 = vadd.f32 %v76, %v156
    %v158 = vpop.f32.mrb[0].mxu0
    %v159 = vpop.f32.mrb[0].mxu0
    %v160 = vpop.f32.mrb[0].mxu0
    %161 = vdwg.mxu0
    %v162 = vmax.f32 %v157, 0.0
    %v163 = vpack.c.bf16 %v162, %v162
    %v164 = vld [vmem:[#allocation7] sm:$0xf]
    %v165 = vld [vmem:[#allocation7 + $0x4] sm:$0xf]
    %v166 = vld [vmem:[#allocation7 + $0x8] sm:$0xf]
    %v167 = vld [vmem:[#allocation7 + $0xc] sm:$0xf]
    %v168 = vld [vmem:[#allocation7 + $0x10] sm:$0xf]
    %v169 = vld [vmem:[#allocation7 + $0x14] sm:$0xf]
    %v170 = vld [vmem:[#allocation7 + $0x18] sm:$0xf]
    %v171 = vld [vmem:[#allocation7 + $0x1c] sm:$0xf]
    %v172 = vld [vmem:[#allocation7 + $0x20] sm:$0xf]
    %v173 = vld [vmem:[#allocation7 + $0x24] sm:$0xf]
    %v174 = vld [vmem:[#allocation7 + $0x28] sm:$0xf]
    %v175 = vld [vmem:[#allocation7 + $0x2c] sm:$0xf]
    %v176 = vld [vmem:[#allocation7 + $0x30] sm:$0xf]
    %v177 = vld [vmem:[#allocation7 + $0x34] sm:$0xf]
    %v178 = vld [vmem:[#allocation7 + $0x38] sm:$0xf]
    %v179 = vld [vmem:[#allocation7 + $0x3c] sm:$0xf]
    %v180 = vld [vmem:[%s4] sm:$0x1]
    %v182 = vlaneseq
    %v183 = vshrl.u32 %v182, 7
    %v184 = vsub.s32 0, %v183
    %v185 = vrot.slane %v180, %v184
    %v203 = vunpack.c.l.b16 %v164
    %v204 = vunpack.c.l.b16 %v165
    %v205 = vunpack.c.l.b16 %v166
    %v206 = vunpack.c.l.b16 %v167
    %v207 = vunpack.c.l.b16 %v168
    %v208 = vunpack.c.l.b16 %v169
    %v209 = vunpack.c.l.b16 %v170
    %v210 = vunpack.c.l.b16 %v171
    %v211 = vunpack.c.l.b16 %v172
    %v212 = vunpack.c.l.b16 %v173
    %v213 = vunpack.c.l.b16 %v174
    %v214 = vunpack.c.l.b16 %v175
    %v215 = vunpack.c.l.b16 %v176
    %v216 = vunpack.c.l.b16 %v177
    %v217 = vunpack.c.l.b16 %v178
    %v218 = vunpack.c.l.b16 %v179
    %v219 = vpack.c.b16 %v204, %v203
    %v220 = vpack.c.b16 %v206, %v205
    %v221 = vpack.c.b16 %v208, %v207
    %v222 = vpack.c.b16 %v210, %v209
    %v223 = vpack.c.b16 %v212, %v211
    %v224 = vpack.c.b16 %v214, %v213
    %v225 = vpack.c.b16 %v216, %v215
    %v226 = vpack.c.b16 %v218, %v217
    %235 = vmatprep.subr.bf16.mxu0 0
    %236 = vmatpush1.bf16.msra.mxu0 %v219
    %237 = vmatprep.subr.bf16.mxu0 0
    %238 = vmatpush1.bf16.msra.mxu0 %v220
    %239 = vmatprep.subr.bf16.mxu0 0
    %240 = vmatpush1.bf16.msra.mxu0 %v221
    %241 = vmatprep.subr.bf16.mxu0 0
    %242 = vmatpush1.bf16.msra.mxu0 %v222
    %243 = vmatprep.subr.bf16.mxu0 0
    %244 = vmatpush1.bf16.msra.mxu0 %v223
    %245 = vmatprep.subr.bf16.mxu0 0
    %246 = vmatpush1.bf16.msra.mxu0 %v224
    %247 = vmatprep.subr.bf16.mxu0 0
    %248 = vmatpush1.bf16.msra.mxu0 %v225
    %249 = vmatprep.subr.bf16.mxu0 0
    %250 = vmatpush1.bf16.msra.mxu0 %v226
    %251 = vmatprep.subr.bf16.mxu0 0
    %252 = vmatpush1.bf16.msra.mxu0 0
    %253 = vmatprep.subr.bf16.mxu0 0
    %254 = vmatpush1.bf16.msra.mxu0 0
    %255 = vmatprep.subr.bf16.mxu0 0
    %256 = vmatpush1.bf16.msra.mxu0 0
    %257 = vmatprep.subr.bf16.mxu0 0
    %258 = vmatpush1.bf16.msra.mxu0 0
    %259 = vmatprep.subr.bf16.mxu0 0
    %260 = vmatpush1.bf16.msra.mxu0 0
    %261 = vmatprep.subr.bf16.mxu0 0
    %262 = vmatpush1.bf16.msra.mxu0 0
    %263 = vmatprep.subr.bf16.mxu0 0
    %264 = vmatpush1.bf16.msra.mxu0 0
    %265 = vmatprep.subr.bf16.mxu0 0
    %266 = vmatpush1.bf16.msra.mxu0 0
    %267 = vmatprep.mubr.bf16.mxu0 0
    %268 = vmatmul.mubr.bf16.gmra.mrb[0].mxu0 %v163
    %v269 = vpop.f32.mrb[0].mxu0
    %v270 = vadd.f32 %v185, %v269
    %v271 = vpop.f32.mrb[0].mxu0
    %v272 = vpop.f32.mrb[0].mxu0
    %v273 = vpop.f32.mrb[0].mxu0
    %274 = vdwg.mxu0
    %vm275 = vcmask 64512
    %276 = vst.msk [vmem:[#allocation8] sm:$0xff] %vm275, %v270
    // Predicated region
    $region34: #{tpu_custom_call.1} parent=1 // pred_check
      _
    $region35: #{tpu_custom_call.1} parent=1 // pred_check_branch
      %278 = sbr.rel (0) target = $region37
    $region36: #{tpu_custom_call.1} parent=1 // pred_region
      %s280 = ssub.s32 128, 32
      %281 = vsyncadd [#allocation4], %s280
      %s282 = sshll.u32 [#allocation8], 4
      %s283 = int_to_ptr.vmem [resolvable:$true] %s282
      %288 = dma.vmem_to_hbm [thread:$0]  %s283, 32, %s5, [#allocation4], 32, 32, 2
    $region37: #{tpu_custom_call.1} parent=1 // pred_fallthru
      _
    // Predicated region
    $region38: #{tpu_custom_call.1} parent=1 // pred_check
      _
    $region39: #{tpu_custom_call.1} parent=1 // pred_check_branch
      %290 = sbr.rel (0) target = $region41
    $region40: #{tpu_custom_call.1} parent=1 // pred_region
      %291 = dma.done [#allocation4], 128
    $region41: #{tpu_custom_call.1} parent=1 // pred_fallthru
      _
    %292 = vsyncpa [#allocation3], 1
    %293 = vsyncpa [#allocation6], 1
    %294 = vsyncpa [#allocation4], 1

</llo_original>
